<compile_context>
chip_gen: v7x
topology: tpu7x:2x2x1
jax: 0.10.0
libtpu: 0.0.40
codegen_flags: <defaults>
</compile_context>

<pallas_src>
import functools

import jax
import jax.numpy as jnp
from jax import lax
from jax.experimental import pallas as pl
from jax.experimental.pallas import tpu as pltpu

LN_EPS = 1e-6
INV_SQRT2 = 0.7071067811865476


def _round_up(x, m):
    return (x + m - 1) // m * m


def mlp_head_kernel(x_ref, w1_ref, b1_ref, gamma_ref, beta_ref, w2_ref, b2_ref,
                    o_ref, h_ref):
    # Grid = (batch tiles, class tiles).  fc1 + GELU + LayerNorm only depend on
    # the batch tile, so compute them once (j == 0) and stash the normalized
    # activations in a bf16 VMEM scratch that persists across the class tiles.
    j = pl.program_id(1)

    @pl.when(j == 0)
    def _():
        # fc1: bf16 operands, f32 accumulation on the MXU.
        h = jnp.dot(x_ref[...], w1_ref[...], preferred_element_type=jnp.float32)
        h = h + b1_ref[...]

        # GELU (exact erf form, matching torch.nn.GELU default), in f32.
        h = 0.5 * h * (1.0 + lax.erf(h * jnp.float32(INV_SQRT2)))

        # LayerNorm over the hidden axis (biased variance, eps = 1e-6), in f32.
        mean = jnp.mean(h, axis=-1, keepdims=True)
        centered = h - mean
        var = jnp.mean(centered * centered, axis=-1, keepdims=True)
        h = centered * lax.rsqrt(var + jnp.float32(LN_EPS))
        h = h * gamma_ref[...] + beta_ref[...]

        # head_dropout has p=0.0 (and eval mode) -> identity.
        # Store bf16 so fc2 gets bf16 MXU operands.
        h_ref[...] = h.astype(h_ref.dtype)

    # fc2 for this class tile: bf16 operands, f32 accumulation.
    out = jnp.dot(h_ref[...], w2_ref[...], preferred_element_type=jnp.float32)
    out = out + b2_ref[...]
    o_ref[...] = out.astype(o_ref.dtype)


@functools.partial(jax.jit, static_argnames=("block_b", "block_n"))
def mlp_head(x, w1, b1, gamma, beta, w2, b2, *, block_b=128, block_n=512):
    B, dim = x.shape
    hidden = w1.shape[1]
    num_classes = w2.shape[1]

    # Batch tile: as large as possible up to block_b, multiple of 8.
    bb = min(block_b, _round_up(B, 8))
    b_pad = _round_up(B, bb)

    # Class tile: lane-dense (multiple of 128); pad num_classes accordingly.
    n_pad = _round_up(num_classes, 128)
    bn = min(block_n, n_pad)
    n_pad = _round_up(n_pad, bn)

    # Pad inputs (zeros) where needed; slice the result afterwards.
    x_p = x if b_pad == B else jnp.pad(x, ((0, b_pad - B), (0, 0)))
    w2_p = w2 if n_pad == num_classes else jnp.pad(
        w2, ((0, 0), (0, n_pad - num_classes)))
    b2_p = b2 if n_pad == num_classes else jnp.pad(
        b2, ((0, 0), (0, n_pad - num_classes)))

    # bf16 MXU operands; biases / LN params stay f32 (added in the f32 path).
    x_bf = x_p.astype(jnp.bfloat16)
    w1_bf = w1.astype(jnp.bfloat16)
    w2_bf = w2_p.astype(jnp.bfloat16)
    b1_f = b1.reshape(1, hidden).astype(jnp.float32)
    gamma_f = gamma.reshape(1, hidden).astype(jnp.float32)
    beta_f = beta.reshape(1, hidden).astype(jnp.float32)
    b2_f = b2_p.reshape(1, n_pad).astype(jnp.float32)

    grid = (b_pad // bb, n_pad // bn)

    # Explicit VMEM budget: double-buffered tiles + scratch, with headroom.
    est = (2 * bb * dim * 2            # x tile (bf16)
           + 2 * dim * hidden * 2      # W1 (bf16)
           + 2 * hidden * bn * 2       # W2 tile (bf16)
           + 2 * (3 * hidden + bn) * 4  # b1/gamma/beta + b2 tile (f32)
           + 2 * bb * bn * 4           # out tile (f32)
           + bb * hidden * 2)          # h scratch (bf16)
    vmem_limit = int(min(max(est * 3 // 2, 32 * 2**20), 96 * 2**20))

    out = pl.pallas_call(
        mlp_head_kernel,
        out_shape=jax.ShapeDtypeStruct((b_pad, n_pad), x.dtype),
        grid=grid,
        in_specs=[
            pl.BlockSpec((bb, dim), lambda i, j: (i, 0)),      # x tile
            pl.BlockSpec((dim, hidden), lambda i, j: (0, 0)),  # W1 (resident)
            pl.BlockSpec((1, hidden), lambda i, j: (0, 0)),    # b1
            pl.BlockSpec((1, hidden), lambda i, j: (0, 0)),    # LN gamma
            pl.BlockSpec((1, hidden), lambda i, j: (0, 0)),    # LN beta
            pl.BlockSpec((hidden, bn), lambda i, j: (0, j)),   # W2 class tile
            pl.BlockSpec((1, bn), lambda i, j: (0, j)),        # b2 class tile
        ],
        out_specs=pl.BlockSpec((bb, bn), lambda i, j: (i, j)),
        scratch_shapes=[pltpu.VMEM((bb, hidden), jnp.bfloat16)],
        compiler_params=pltpu.CompilerParams(
            dimension_semantics=("parallel", "arbitrary"),
            vmem_limit_bytes=vmem_limit),
    )(x_bf, w1_bf, b1_f, gamma_f, beta_f, w2_bf, b2_f)

    return out[:B, :num_classes]


def reference_f32(x, w1, b1, gamma, beta, w2, b2):
    h = x @ w1 + b1
    h = 0.5 * h * (1.0 + lax.erf(h * jnp.float32(INV_SQRT2)))
    mean = jnp.mean(h, axis=-1, keepdims=True)
    var = jnp.mean((h - mean) ** 2, axis=-1, keepdims=True)
    h = (h - mean) * lax.rsqrt(var + LN_EPS)
    h = h * gamma + beta
    return h @ w2 + b2


def reference_bf16(x, w1, b1, gamma, beta, w2, b2):
    # Mirrors the kernel's mixed precision: bf16 matmul operands, f32 elsewhere.
    h = jnp.dot(x.astype(jnp.bfloat16), w1.astype(jnp.bfloat16),
                preferred_element_type=jnp.float32) + b1
    h = 0.5 * h * (1.0 + lax.erf(h * jnp.float32(INV_SQRT2)))
    mean = jnp.mean(h, axis=-1, keepdims=True)
    var = jnp.mean((h - mean) ** 2, axis=-1, keepdims=True)
    h = (h - mean) * lax.rsqrt(var + LN_EPS)
    h = (h * gamma + beta).astype(jnp.bfloat16)
    return jnp.dot(h, w2.astype(jnp.bfloat16),
                   preferred_element_type=jnp.float32) + b2


if __name__ == "__main__":
    # Small shapes consistent with MlpHead(dim, num_classes=1000, mlp_ratio=4)
    B = 8
    dim = 64
    mlp_ratio = 4
    hidden = mlp_ratio * dim           # 256
    num_classes = 1000                 # exercises the 128-pad + class tiling path

    key = jax.random.PRNGKey(0)
    kx, kw1, kb1, kw2, kb2 = jax.random.split(key, 5)

    x = jax.random.normal(kx, (B, dim), dtype=jnp.float32)

    # Deterministic synthetic parameters (stored as (in, out) = torch weight.T)
    w1 = jax.random.normal(kw1, (dim, hidden), dtype=jnp.float32) * 0.02
    b1 = jax.random.normal(kb1, (1, hidden), dtype=jnp.float32) * 0.01
    gamma = jnp.ones((1, hidden), dtype=jnp.float32)
    beta = jnp.zeros((1, hidden), dtype=jnp.float32)
    w2 = jax.random.normal(kw2, (hidden, num_classes), dtype=jnp.float32) * 0.02
    b2 = jax.random.normal(kb2, (1, num_classes), dtype=jnp.float32) * 0.01

    out = mlp_head(x, w1, b1, gamma, beta, w2, b2)
    out = jax.block_until_ready(out)
    assert out.shape == (B, num_classes)

    ref_mixed = reference_bf16(x, w1, b1, gamma, beta, w2, b2)
    ref_full = reference_f32(x, w1, b1, gamma, beta, w2, b2)
    assert jnp.allclose(out, ref_mixed, atol=5e-3, rtol=5e-3), (
        float(jnp.max(jnp.abs(out - ref_mixed))))
    assert jnp.allclose(out, ref_full, atol=5e-2, rtol=5e-2), (
        float(jnp.max(jnp.abs(out - ref_full))))

    print("KERNEL_OK")
</pallas_src>

<mosaic_0001>
module attributes {stable_mosaic.version = 11 : i64} {
  func.func @mlp_head_kernel(%arg0: i32, %arg1: i32, %arg2: memref<8x64xbf16, #tpu.memory_space<vmem>>, %arg3: memref<64x256xbf16, #tpu.memory_space<vmem>>, %arg4: memref<1x256xf32, #tpu.memory_space<vmem>>, %arg5: memref<1x256xf32, #tpu.memory_space<vmem>>, %arg6: memref<1x256xf32, #tpu.memory_space<vmem>>, %arg7: memref<256x512xbf16, #tpu.memory_space<vmem>>, %arg8: memref<1x512xf32, #tpu.memory_space<vmem>>, %arg9: memref<8x512xf32, #tpu.memory_space<vmem>>, %arg10: memref<8x256xbf16, #tpu.memory_space<vmem>>) attributes {dimension_semantics = [#tpu.dimension_semantics<parallel>, #tpu.dimension_semantics<arbitrary>], iteration_bounds = array<i64: 1, 2>, scalar_prefetch = 0 : i64, scratch_operands = 1 : i64, tpu.core_type = #tpu.core_type<tc>, window_params = [{transform_indices = @transform_0, window_bounds = array<i64: 8, 64>}, {pipeline_mode = #tpu.pipeline_mode<synchronous>, transform_indices = @transform_1, window_bounds = array<i64: 64, 256>}, {pipeline_mode = #tpu.pipeline_mode<synchronous>, transform_indices = @transform_2, window_bounds = array<i64: 1, 256>}, {pipeline_mode = #tpu.pipeline_mode<synchronous>, transform_indices = @transform_3, window_bounds = array<i64: 1, 256>}, {pipeline_mode = #tpu.pipeline_mode<synchronous>, transform_indices = @transform_4, window_bounds = array<i64: 1, 256>}, {transform_indices = @transform_5, window_bounds = array<i64: 256, 512>}, {transform_indices = @transform_6, window_bounds = array<i64: 1, 512>}, {transform_indices = @transform_7, window_bounds = array<i64: 8, 512>}]} {
    %c0_i32 = arith.constant 0 : i32
    %0 = arith.cmpi eq, %arg1, %c0_i32 : i32
    %1 = arith.extui %0 : i1 to i32
    %c0_i32_0 = arith.constant 0 : i32
    %2 = arith.cmpi ne, %1, %c0_i32_0 : i32
    scf.if %2 {
      %c0_8 = arith.constant 0 : index
      %c0_9 = arith.constant 0 : index
      %10 = vector.load %arg2[%c0_8, %c0_9] : memref<8x64xbf16, #tpu.memory_space<vmem>>, vector<8x64xbf16>
      %c0_10 = arith.constant 0 : index
      %c0_11 = arith.constant 0 : index
      %11 = vector.load %arg3[%c0_10, %c0_11] : memref<64x256xbf16, #tpu.memory_space<vmem>>, vector<64x256xbf16>
      %cst_12 = arith.constant dense<0.000000e+00> : vector<8x256xf32>
      %12 = tpu.matmul %10, %11, %cst_12 {dimension_numbers = #tpu.dot_dimension_numbers<[1], [0], [0], [1], [0, 0, 1, 1], [], []>} : vector<8x64xbf16>, vector<64x256xbf16>, vector<8x256xf32> -> vector<8x256xf32>
      %c0_13 = arith.constant 0 : index
      %c0_14 = arith.constant 0 : index
      %13 = vector.load %arg4[%c0_13, %c0_14] : memref<1x256xf32, #tpu.memory_space<vmem>>, vector<1x256xf32>
      %14 = vector.broadcast %13 : vector<1x256xf32> to vector<8x256xf32>
      %15 = arith.addf %12, %14 : vector<8x256xf32>
      %cst_15 = arith.constant 5.000000e-01 : f32
      %16 = vector.broadcast %cst_15 : f32 to vector<8x256xf32>
      %17 = arith.mulf %16, %15 : vector<8x256xf32>
      %cst_16 = arith.constant 0.707106769 : f32
      %18 = vector.broadcast %cst_16 : f32 to vector<8x256xf32>
      %19 = arith.mulf %15, %18 : vector<8x256xf32>
      %20 = math.erf %19 : vector<8x256xf32>
      %cst_17 = arith.constant 1.000000e+00 : f32
      %21 = vector.broadcast %cst_17 : f32 to vector<8x256xf32>
      %22 = arith.addf %21, %20 : vector<8x256xf32>
      %23 = arith.mulf %17, %22 : vector<8x256xf32>
      %cst_18 = arith.constant dense<0.000000e+00> : vector<8xf32>
      %24 = vector.multi_reduction <add>, %23, %cst_18 [1] : vector<8x256xf32> to vector<8xf32>
      %25 = vector.shape_cast %24 : vector<8xf32> to vector<8x1xf32>
      %cst_19 = arith.constant 2.560000e+02 : f32
      %26 = vector.broadcast %cst_19 : f32 to vector<8x1xf32>
      %27 = arith.divf %25, %26 : vector<8x1xf32>
      %28 = vector.broadcast %27 : vector<8x1xf32> to vector<8x256xf32>
      %29 = arith.subf %23, %28 : vector<8x256xf32>
      %30 = arith.mulf %29, %29 : vector<8x256xf32>
      %cst_20 = arith.constant dense<0.000000e+00> : vector<8xf32>
      %31 = vector.multi_reduction <add>, %30, %cst_20 [1] : vector<8x256xf32> to vector<8xf32>
      %32 = vector.shape_cast %31 : vector<8xf32> to vector<8x1xf32>
      %cst_21 = arith.constant 2.560000e+02 : f32
      %33 = vector.broadcast %cst_21 : f32 to vector<8x1xf32>
      %34 = arith.divf %32, %33 : vector<8x1xf32>
      %cst_22 = arith.constant 9.99999997E-7 : f32
      %35 = vector.broadcast %cst_22 : f32 to vector<8x1xf32>
      %36 = arith.addf %34, %35 : vector<8x1xf32>
      %37 = math.rsqrt %36 : vector<8x1xf32>
      %38 = vector.broadcast %37 : vector<8x1xf32> to vector<8x256xf32>
      %39 = arith.mulf %29, %38 : vector<8x256xf32>
      %c0_23 = arith.constant 0 : index
      %c0_24 = arith.constant 0 : index
      %40 = vector.load %arg5[%c0_23, %c0_24] : memref<1x256xf32, #tpu.memory_space<vmem>>, vector<1x256xf32>
      %41 = vector.broadcast %40 : vector<1x256xf32> to vector<8x256xf32>
      %42 = arith.mulf %39, %41 : vector<8x256xf32>
      %c0_25 = arith.constant 0 : index
      %c0_26 = arith.constant 0 : index
      %43 = vector.load %arg6[%c0_25, %c0_26] : memref<1x256xf32, #tpu.memory_space<vmem>>, vector<1x256xf32>
      %44 = vector.broadcast %43 : vector<1x256xf32> to vector<8x256xf32>
      %45 = arith.addf %42, %44 : vector<8x256xf32>
      %46 = arith.truncf %45 : vector<8x256xf32> to vector<8x256xbf16>
      %c0_27 = arith.constant 0 : index
      %c0_28 = arith.constant 0 : index
      %47 = vector.load %arg10[%c0_27, %c0_28] : memref<8x256xbf16, #tpu.memory_space<vmem>>, vector<8x256xbf16>
      tpu.vector_store %arg10[%c0_27, %c0_28], %46 {strides = array<i32>} : memref<8x256xbf16, #tpu.memory_space<vmem>>, vector<8x256xbf16>,
    } else {
    }
    %c0 = arith.constant 0 : index
    %c0_1 = arith.constant 0 : index
    %3 = vector.load %arg10[%c0, %c0_1] : memref<8x256xbf16, #tpu.memory_space<vmem>>, vector<8x256xbf16>
    %c0_2 = arith.constant 0 : index
    %c0_3 = arith.constant 0 : index
    %4 = vector.load %arg7[%c0_2, %c0_3] : memref<256x512xbf16, #tpu.memory_space<vmem>>, vector<256x512xbf16>
    %cst = arith.constant dense<0.000000e+00> : vector<8x512xf32>
    %5 = tpu.matmul %3, %4, %cst {dimension_numbers = #tpu.dot_dimension_numbers<[1], [0], [0], [1], [0, 0, 1, 1], [], []>} : vector<8x256xbf16>, vector<256x512xbf16>, vector<8x512xf32> -> vector<8x512xf32>
    %c0_4 = arith.constant 0 : index
    %c0_5 = arith.constant 0 : index
    %6 = vector.load %arg8[%c0_4, %c0_5] : memref<1x512xf32, #tpu.memory_space<vmem>>, vector<1x512xf32>
    %7 = vector.broadcast %6 : vector<1x512xf32> to vector<8x512xf32>
    %8 = arith.addf %5, %7 : vector<8x512xf32>
    %c0_6 = arith.constant 0 : index
    %c0_7 = arith.constant 0 : index
    %9 = vector.load %arg9[%c0_6, %c0_7] : memref<8x512xf32, #tpu.memory_space<vmem>>, vector<8x512xf32>
    tpu.vector_store %arg9[%c0_6, %c0_7], %8 {strides = array<i32>} : memref<8x512xf32, #tpu.memory_space<vmem>>, vector<8x512xf32>,
    return
  }
  func.func @transform_0(%arg0: i32, %arg1: i32) -> (i32, i32) {
    %c0_i32 = arith.constant 0 : i32
    %c0_i32_0 = arith.constant 0 : i32
    return %arg0, %c0_i32 : i32, i32
  }
  func.func @transform_1(%arg0: i32, %arg1: i32) -> (i32, i32) {
    %c0_i32 = arith.constant 0 : i32
    %c0_i32_0 = arith.constant 0 : i32
    %c0_i32_1 = arith.constant 0 : i32
    return %c0_i32, %c0_i32_0 : i32, i32
  }
  func.func @transform_2(%arg0: i32, %arg1: i32) -> (i32, i32) {
    %c0_i32 = arith.constant 0 : i32
    %c0_i32_0 = arith.constant 0 : i32
    %c0_i32_1 = arith.constant 0 : i32
    return %c0_i32, %c0_i32_0 : i32, i32
  }
  func.func @transform_3(%arg0: i32, %arg1: i32) -> (i32, i32) {
    %c0_i32 = arith.constant 0 : i32
    %c0_i32_0 = arith.constant 0 : i32
    %c0_i32_1 = arith.constant 0 : i32
    return %c0_i32, %c0_i32_0 : i32, i32
  }
  func.func @transform_4(%arg0: i32, %arg1: i32) -> (i32, i32) {
    %c0_i32 = arith.constant 0 : i32
    %c0_i32_0 = arith.constant 0 : i32
    %c0_i32_1 = arith.constant 0 : i32
    return %c0_i32, %c0_i32_0 : i32, i32
  }
  func.func @transform_5(%arg0: i32, %arg1: i32) -> (i32, i32) {
    %c0_i32 = arith.constant 0 : i32
    %c0_i32_0 = arith.constant 0 : i32
    return %c0_i32, %arg1 : i32, i32
  }
  func.func @transform_6(%arg0: i32, %arg1: i32) -> (i32, i32) {
    %c0_i32 = arith.constant 0 : i32
    %c0_i32_0 = arith.constant 0 : i32
    return %c0_i32, %arg1 : i32, i32
  }
  func.func @transform_7(%arg0: i32, %arg1: i32) -> (i32, i32) {
    %c0_i32 = arith.constant 0 : i32
    return %arg0, %arg1 : i32, i32
  }
}

</mosaic_0001>

<llo_original>
// kernel: mlp_head.1
$region0: #{mlp_head.1}
  #allocation0 [shape = 'u32[]', space=smem, size = 0x4, offset = 0x4, fixed_abs, tag = 'smem constant byte address 0x4 - core index']
  #allocation1 [shape = 'u32[144,128]{1,0:T(1,128)}', space=vmem, size = 0x12000, scoped, tag = 'internal scratch']
  #allocation2 [shape = 'bf16[8,256]{1,0:T(8,128)(2,1)}', space=vmem, size = 0x1000, scoped, tag = 'scratch operand']
  %s0 = inlined_call_operand.vmem [shape: bf16[8,64], index: 0, kind: input, shape index: {}]
  %s1 = inlined_call_operand.vmem [shape: bf16[64,256], index: 1, kind: input, shape index: {}]
  %s2 = inlined_call_operand.vmem [shape: f32[1,256], index: 2, kind: input, shape index: {}]
  %s3 = inlined_call_operand.vmem [shape: f32[1,256], index: 3, kind: input, shape index: {}]
  %s4 = inlined_call_operand.vmem [shape: f32[1,256], index: 4, kind: input, shape index: {}]
  %s5 = inlined_call_operand.vmem [shape: bf16[256,1024], index: 5, kind: input, shape index: {}]
  %s6 = inlined_call_operand.vmem [shape: f32[1,1024], index: 6, kind: input, shape index: {}]
  %s7 = inlined_call_operand.hbm [shape: f32[8,1024], index: 7, kind: output, shape index: {}]
  %s8 = sld [smem:[#allocation0]]
  $region88: #{mlp_head.1} parent=0
    _
  %s10 = ssub.s32 1, %s8
  %s11 = scalar_select 0, %s10, %s8
  $region1: #{mlp_head.1} parent=0
    #allocation3 [shape = 'u8[524288]{0}', space=vmem, size = 0x80000, scoped, tag = 'input window, operand 5']
    #allocation4 [shape = 'u8[32768]{0}', space=vmem, size = 0x8000, scoped, tag = 'output window, operand 0']
    #allocation5 [shape = 's32[2]{0}', space=sflag, size = 0x8, scoped, tag = 'scoped memory for mlp_head.1']
    %12 = vsyncpa [#allocation5], 0
    %s13 = scalar_lea.sflag [#allocation5], 1
    %14 = vsyncpa %s13, 0
    loop: start=0, step=1, limit=4
    $region2: #{mlp_head.1} parent=1 // loop_pre_header
      _
    $region3: #{mlp_head.1} parent=1 // loop_header
      %s16 = sphi 0, %s20
      %p17 = scmp.ge.s32.totalorder %s16, 4
      %s23 = sphi 0, %s35
      %s24 = sphi 0, %s31
      %s25 = sphi 0, %s23
      %s26 = sphi 0, %s24
      %s27 = sphi 0, %s25
      %s28 = sphi 0, %s26
      %s38 = sphi 0, %s40
      %s41 = sphi 0, %s38
      %s42 = sphi 0, %s41
      %s58 = sphi 0, %s42
      %s62 = sphi 0, %s62
      %s64 = sphi 0, %s62
      %s65 = sphi 0, %s64
      %s79 = sphi 0, %s65
      %s83 = sphi 0, %s83
      %s85 = sphi 0, %s83
      %s86 = sphi 0, %s85
      %s100 = sphi 0, %s86
      %s104 = sphi 0, %s104
      %s106 = sphi 0, %s104
      %s107 = sphi 0, %s106
      %s121 = sphi 0, %s107
      %s125 = sphi 0, %s125
      %s127 = sphi 0, %s125
      %s128 = sphi 0, %s127
      %s142 = sphi 0, %s128
      %s148 = sphi 0, %s150
      %s151 = sphi 0, %s148
      %s152 = sphi 0, %s151
      %s168 = sphi 0, %s152
      %s174 = sphi 0, %s176
      %s177 = sphi 0, %s174
      %s178 = sphi 0, %s177
      %s194 = sphi 0, %s178
      %s202 = sphi 0, %s204
      %s205 = sphi 0, %s202
      %s206 = sphi 0, %s205
      %s222 = sphi 0, %s206
    $region4: #{mlp_head.1} parent=1 // loop_header_branch
      %19 = sbr.rel (%p17) target = $region8
    $region5: #{mlp_head.1} parent=1 // loop_body
      %s21 = ssub.s32 %s16, 1
      %s22 = ssub.s32 %s16, 2
      %s29 = sadd.s32 1, %s24
      %p30 = scmp.ge.s32.totalorder %s29, 2
      %s31 = scalar_select %p30, 0, %s29
      %s32 = sadd.s32 1, %s23
      %s33 = scalar_select %p30, %s32, %s23
      %p34 = scmp.ge.s32.totalorder %s33, 1
      %s35 = scalar_select %p34, 0, %s33
      %s36 = ssub.s32 %s23, %s35
      %p37 = scmp.eq.s32.totalorder %s36, 0
      %s39 = sadd.s32 %s38, 1
      %s40 = scalar_select %p37, %s38, %s39
      %p43 = pneg %p37
      %p44 = scmp.eq.s32.totalorder %s16, 1
      %p45 = por %p43, %p44
      %p46 = scmp.ne.s32.totalorder %s38, %s41
      %p47 = scmp.eq.s32.totalorder %s16, 0
      %p48 = por %p46, %p47
      %p49 = scmp.ne.s32.totalorder %s38, %s41
      %p50 = scmp.eq.s32.totalorder %s21, 1
      %p51 = por %p49, %p50
      %p52 = scmp.ne.s32.totalorder %s41, %s42
      %p53 = scmp.eq.s32.totalorder %s21, 0
      %p54 = por %p52, %p53
      %p55 = scmp.ne.s32.totalorder %s41, %s42
      %p56 = scmp.eq.s32.totalorder %s22, 1
      %p57 = por %p55, %p56
      %p59 = scmp.ne.s32.totalorder %s42, %s58
      %p60 = scmp.eq.s32.totalorder %s22, 0
      %p61 = por %p59, %p60
      %s63 = sadd.s32 %s62, 1
      %p66 = scmp.eq.s32.totalorder %s16, 1
      %p67 = scmp.ne.s32.totalorder %s62, %s64
      %p68 = scmp.eq.s32.totalorder %s16, 0
      %p69 = por %p67, %p68
      %p70 = scmp.ne.s32.totalorder %s62, %s64
      %p71 = scmp.eq.s32.totalorder %s21, 1
      %p72 = por %p70, %p71
      %p73 = scmp.ne.s32.totalorder %s64, %s65
      %p74 = scmp.eq.s32.totalorder %s21, 0
      %p75 = por %p73, %p74
      %p76 = scmp.ne.s32.totalorder %s64, %s65
      %p77 = scmp.eq.s32.totalorder %s22, 1
      %p78 = por %p76, %p77
      %p80 = scmp.ne.s32.totalorder %s65, %s79
      %p81 = scmp.eq.s32.totalorder %s22, 0
      %p82 = por %p80, %p81
      %s84 = sadd.s32 %s83, 1
      %p87 = scmp.eq.s32.totalorder %s16, 1
      %p88 = scmp.ne.s32.totalorder %s83, %s85
      %p89 = scmp.eq.s32.totalorder %s16, 0
      %p90 = por %p88, %p89
      %p91 = scmp.ne.s32.totalorder %s83, %s85
      %p92 = scmp.eq.s32.totalorder %s21, 1
      %p93 = por %p91, %p92
      %p94 = scmp.ne.s32.totalorder %s85, %s86
      %p95 = scmp.eq.s32.totalorder %s21, 0
      %p96 = por %p94, %p95
      %p97 = scmp.ne.s32.totalorder %s85, %s86
      %p98 = scmp.eq.s32.totalorder %s22, 1
      %p99 = por %p97, %p98
      %p101 = scmp.ne.s32.totalorder %s86, %s100
      %p102 = scmp.eq.s32.totalorder %s22, 0
      %p103 = por %p101, %p102
      %s105 = sadd.s32 %s104, 1
      %p108 = scmp.eq.s32.totalorder %s16, 1
      %p109 = scmp.ne.s32.totalorder %s104, %s106
      %p110 = scmp.eq.s32.totalorder %s16, 0
      %p111 = por %p109, %p110
      %p112 = scmp.ne.s32.totalorder %s104, %s106
      %p113 = scmp.eq.s32.totalorder %s21, 1
      %p114 = por %p112, %p113
      %p115 = scmp.ne.s32.totalorder %s106, %s107
      %p116 = scmp.eq.s32.totalorder %s21, 0
      %p117 = por %p115, %p116
      %p118 = scmp.ne.s32.totalorder %s106, %s107
      %p119 = scmp.eq.s32.totalorder %s22, 1
      %p120 = por %p118, %p119
      %p122 = scmp.ne.s32.totalorder %s107, %s121
      %p123 = scmp.eq.s32.totalorder %s22, 0
      %p124 = por %p122, %p123
      %s126 = sadd.s32 %s125, 1
      %p129 = scmp.eq.s32.totalorder %s16, 1
      %p130 = scmp.ne.s32.totalorder %s125, %s127
      %p131 = scmp.eq.s32.totalorder %s16, 0
      %p132 = por %p130, %p131
      %p133 = scmp.ne.s32.totalorder %s125, %s127
      %p134 = scmp.eq.s32.totalorder %s21, 1
      %p135 = por %p133, %p134
      %p136 = scmp.ne.s32.totalorder %s127, %s128
      %p137 = scmp.eq.s32.totalorder %s21, 0
      %p138 = por %p136, %p137
      %p139 = scmp.ne.s32.totalorder %s127, %s128
      %p140 = scmp.eq.s32.totalorder %s22, 1
      %p141 = por %p139, %p140
      %p143 = scmp.ne.s32.totalorder %s128, %s142
      %p144 = scmp.eq.s32.totalorder %s22, 0
      %p145 = por %p143, %p144
      %s146 = ssub.s32 %s24, %s31
      %p147 = scmp.eq.s32.totalorder %s146, 0
      %s149 = sadd.s32 %s148, 1
      %s150 = scalar_select %p147, %s148, %s149
      %p153 = pneg %p147
      %p154 = scmp.eq.s32.totalorder %s16, 1
      %p155 = por %p153, %p154
      %p156 = scmp.ne.s32.totalorder %s148, %s151
      %p157 = scmp.eq.s32.totalorder %s16, 0
      %p158 = por %p156, %p157
      %p159 = scmp.ne.s32.totalorder %s148, %s151
      %p160 = scmp.eq.s32.totalorder %s21, 1
      %p161 = por %p159, %p160
      %p162 = scmp.ne.s32.totalorder %s151, %s152
      %p163 = scmp.eq.s32.totalorder %s21, 0
      %p164 = por %p162, %p163
      %p165 = scmp.ne.s32.totalorder %s151, %s152
      %p166 = scmp.eq.s32.totalorder %s22, 1
      %p167 = por %p165, %p166
      %p169 = scmp.ne.s32.totalorder %s152, %s168
      %p170 = scmp.eq.s32.totalorder %s22, 0
      %p171 = por %p169, %p170
      %s172 = ssub.s32 %s24, %s31
      %p173 = scmp.eq.s32.totalorder %s172, 0
      %s175 = sadd.s32 %s174, 1
      %s176 = scalar_select %p173, %s174, %s175
      %p179 = pneg %p173
      %p180 = scmp.eq.s32.totalorder %s16, 1
      %p181 = por %p179, %p180
      %p182 = scmp.ne.s32.totalorder %s174, %s177
      %p183 = scmp.eq.s32.totalorder %s16, 0
      %p184 = por %p182, %p183
      %p185 = scmp.ne.s32.totalorder %s174, %s177
      %p186 = scmp.eq.s32.totalorder %s21, 1
      %p187 = por %p185, %p186
      %p188 = scmp.ne.s32.totalorder %s177, %s178
      %p189 = scmp.eq.s32.totalorder %s21, 0
      %p190 = por %p188, %p189
      %p191 = scmp.ne.s32.totalorder %s177, %s178
      %p192 = scmp.eq.s32.totalorder %s22, 1
      %p193 = por %p191, %p192
      %p195 = scmp.ne.s32.totalorder %s178, %s194
      %p196 = scmp.eq.s32.totalorder %s22, 0
      %p197 = por %p195, %p196
      %s198 = ssub.s32 %s23, %s35
      %s199 = ssub.s32 %s24, %s31
      %s200 = sor.u32 %s198, %s199
      %p201 = scmp.eq.s32.totalorder %s200, 0
      %s203 = sadd.s32 %s202, 1
      %s204 = scalar_select %p201, %s202, %s203
      %p207 = pneg %p201
      %p208 = scmp.eq.s32.totalorder %s16, 1
      %p209 = por %p207, %p208
      %p210 = scmp.ne.s32.totalorder %s202, %s205
      %p211 = scmp.eq.s32.totalorder %s16, 0
      %p212 = por %p210, %p211
      %p213 = scmp.ne.s32.totalorder %s202, %s205
      %p214 = scmp.eq.s32.totalorder %s21, 1
      %p215 = por %p213, %p214
      %p216 = scmp.ne.s32.totalorder %s205, %s206
      %p217 = scmp.eq.s32.totalorder %s21, 0
      %p218 = por %p216, %p217
      %p219 = scmp.ne.s32.totalorder %s205, %s206
      %p220 = scmp.eq.s32.totalorder %s22, 1
      %p221 = por %p219, %p220
      %p223 = scmp.ne.s32.totalorder %s206, %s222
      %p224 = scmp.eq.s32.totalorder %s22, 0
      %p225 = por %p223, %p224
      %p226 = scmp.le.s32.totalorder 1, %s16
      %p227 = scmp.lt.s32.totalorder %s16, 3
      %p228 = pnand %p226, %p227
      %p229 = pneg %p228
      // Predicated region
      $region9: #{mlp_head.1} parent=5 // pred_check
        _
      $region10: #{mlp_head.1} parent=5 // pred_check_branch
        %231 = sbr.rel (%p228) target = $region12
      $region11: #{mlp_head.1} parent=5 // pred_region
        %s232 = ssub.s32 %s16, 1
        // Predicated region
        $region13: #{mlp_head.1} parent=11 // pred_check
          %p233 = pneg %p54
        $region14: #{mlp_head.1} parent=11 // pred_check_branch
          %235 = sbr.rel (%p233) target = $region16
        $region15: #{mlp_head.1} parent=11 // pred_region
          %p236 = scmp.lt.s32.totalorder %s25, 0
          %s237 = scalar_select %p236, %s25, 0
          %s238 = smul.addr %s237, 4
          %s239 = scalar_lea.vmem %s0, %s238
        $region16: #{mlp_head.1} parent=11 // pred_fallthru
          _
        // Predicated region
        $region17: #{mlp_head.1} parent=11 // pred_check
          %p240 = pneg %p75
        $region18: #{mlp_head.1} parent=11 // pred_check_branch
          %242 = sbr.rel (%p240) target = $region20
        $region19: #{mlp_head.1} parent=11 // pred_region
          _
        $region20: #{mlp_head.1} parent=11 // pred_fallthru
          _
        // Predicated region
        $region21: #{mlp_head.1} parent=11 // pred_check
          %p243 = pneg %p96
        $region22: #{mlp_head.1} parent=11 // pred_check_branch
          %245 = sbr.rel (%p243) target = $region24
        $region23: #{mlp_head.1} parent=11 // pred_region
          _
        $region24: #{mlp_head.1} parent=11 // pred_fallthru
          _
        // Predicated region
        $region25: #{mlp_head.1} parent=11 // pred_check
          %p246 = pneg %p117
        $region26: #{mlp_head.1} parent=11 // pred_check_branch
          %248 = sbr.rel (%p246) target = $region28
        $region27: #{mlp_head.1} parent=11 // pred_region
          _
        $region28: #{mlp_head.1} parent=11 // pred_fallthru
          _
        // Predicated region
        $region29: #{mlp_head.1} parent=11 // pred_check
          %p249 = pneg %p138
        $region30: #{mlp_head.1} parent=11 // pred_check_branch
          %251 = sbr.rel (%p249) target = $region32
        $region31: #{mlp_head.1} parent=11 // pred_region
          _
        $region32: #{mlp_head.1} parent=11 // pred_fallthru
          _
      $region12: #{mlp_head.1} parent=5 // pred_fallthru
        _
      %p252 = scmp.lt.s32.totalorder %s16, 2
      // Predicated region
      $region33: #{mlp_head.1} parent=5 // pred_check
        %p253 = pneg %p252
      $region34: #{mlp_head.1} parent=5 // pred_check_branch
        %255 = sbr.rel (%p253) target = $region36
      $region35: #{mlp_head.1} parent=5 // pred_region
        // Predicated region
        $region37: #{mlp_head.1} parent=35 // pred_check
          %p256 = pneg %p158
        $region38: #{mlp_head.1} parent=35 // pred_check_branch
          %258 = sbr.rel (%p256) target = $region40
        $region39: #{mlp_head.1} parent=35 // pred_region
          %s259 = sand.u32 %s148, 1
          %s260 = sand.u32 %s148, 1
          %s261 = smul.addr %s260, 512
          %s262 = scalar_lea.vmem [#allocation3], %s261
          %s263 = smul.u32 4, %s24
          %s264 = smul.addr %s263, 4
          %s265 = scalar_lea.vmem %s5, %s264
          // Predicated region
          $region41: #{mlp_head.1} parent=39 // pred_check
            _
          $region42: #{mlp_head.1} parent=39 // pred_check_branch
            %267 = sbr.rel (0) target = $region44
          $region43: #{mlp_head.1} parent=39 // pred_region
            // Predicated region
            $region45: #{mlp_head.1} parent=43 // pred_check
              _
            $region46: #{mlp_head.1} parent=43 // pred_check_branch
              %269 = sbr.rel (0) target = $region48
            $region47: #{mlp_head.1} parent=43 // pred_region
              loop: start=0, step=1, limit=1
              $region49: #{mlp_head.1} parent=47 // loop_pre_header
                _
              $region50: #{mlp_head.1} parent=47 // loop_header
                %s271 = sphi 0, %s275
                %p272 = scmp.ge.s32.totalorder %s271, 1
                %s276 = sphi %s265, %s265
                %s277 = sphi %s262, %s262
              $region51: #{mlp_head.1} parent=47 // loop_header_branch
                %274 = sbr.rel (%p272) target = $region55
              $region52: #{mlp_head.1} parent=47 // loop_body
                %v278 = vld [vmem:[%s276] sm:$0xff]
                %279 = vst [vmem:[%s277] sm:$0xff] %v278
                %v280 = vld [vmem:[%s276 + $0x8] sm:$0xff]
                %281 = vst [vmem:[%s277 + $0x8] sm:$0xff] %v280
                %v282 = vld [vmem:[%s276 + $0x20] sm:$0xff]
                %283 = vst [vmem:[%s277 + $0x10] sm:$0xff] %v282
                %v284 = vld [vmem:[%s276 + $0x28] sm:$0xff]
                %285 = vst [vmem:[%s277 + $0x18] sm:$0xff] %v284
                %v286 = vld [vmem:[%s276 + $0x40] sm:$0xff]
                %287 = vst [vmem:[%s277 + $0x20] sm:$0xff] %v286
                %v288 = vld [vmem:[%s276 + $0x48] sm:$0xff]
                %289 = vst [vmem:[%s277 + $0x28] sm:$0xff] %v288
                %v290 = vld [vmem:[%s276 + $0x60] sm:$0xff]
                %291 = vst [vmem:[%s277 + $0x30] sm:$0xff] %v290
                %v292 = vld [vmem:[%s276 + $0x68] sm:$0xff]
                %293 = vst [vmem:[%s277 + $0x38] sm:$0xff] %v292
                %v294 = vld [vmem:[%s276 + $0x80] sm:$0xff]
                %295 = vst [vmem:[%s277 + $0x40] sm:$0xff] %v294
                %v296 = vld [vmem:[%s276 + $0x88] sm:$0xff]
                %297 = vst [vmem:[%s277 + $0x48] sm:$0xff] %v296
                %v298 = vld [vmem:[%s276 + $0xa0] sm:$0xff]
                %299 = vst [vmem:[%s277 + $0x50] sm:$0xff] %v298
                %v300 = vld [vmem:[%s276 + $0xa8] sm:$0xff]
                %301 = vst [vmem:[%s277 + $0x58] sm:$0xff] %v300
                %v302 = vld [vmem:[%s276 + $0xc0] sm:$0xff]
                %303 = vst [vmem:[%s277 + $0x60] sm:$0xff] %v302
                %v304 = vld [vmem:[%s276 + $0xc8] sm:$0xff]
                %305 = vst [vmem:[%s277 + $0x68] sm:$0xff] %v304
                %v306 = vld [vmem:[%s276 + $0xe0] sm:$0xff]
                %307 = vst [vmem:[%s277 + $0x70] sm:$0xff] %v306
                %v308 = vld [vmem:[%s276 + $0xe8] sm:$0xff]
                %309 = vst [vmem:[%s277 + $0x78] sm:$0xff] %v308
                %v310 = vld [vmem:[%s276 + $0x100] sm:$0xff]
                %311 = vst [vmem:[%s277 + $0x80] sm:$0xff] %v310
                %v312 = vld [vmem:[%s276 + $0x108] sm:$0xff]
                %313 = vst [vmem:[%s277 + $0x88] sm:$0xff] %v312
                %v314 = vld [vmem:[%s276 + $0x120] sm:$0xff]
                %315 = vst [vmem:[%s277 + $0x90] sm:$0xff] %v314
                %v316 = vld [vmem:[%s276 + $0x128] sm:$0xff]
                %317 = vst [vmem:[%s277 + $0x98] sm:$0xff] %v316
                %v318 = vld [vmem:[%s276 + $0x140] sm:$0xff]
                %319 = vst [vmem:[%s277 + $0xa0] sm:$0xff] %v318
                %v320 = vld [vmem:[%s276 + $0x148] sm:$0xff]
                %321 = vst [vmem:[%s277 + $0xa8] sm:$0xff] %v320
                %v322 = vld [vmem:[%s276 + $0x160] sm:$0xff]
                %323 = vst [vmem:[%s277 + $0xb0] sm:$0xff] %v322
                %v324 = vld [vmem:[%s276 + $0x168] sm:$0xff]
                %325 = vst [vmem:[%s277 + $0xb8] sm:$0xff] %v324
                %v326 = vld [vmem:[%s276 + $0x180] sm:$0xff]
                %327 = vst [vmem:[%s277 + $0xc0] sm:$0xff] %v326
                %v328 = vld [vmem:[%s276 + $0x188] sm:$0xff]
                %329 = vst [vmem:[%s277 + $0xc8] sm:$0xff] %v328
                %v330 = vld [vmem:[%s276 + $0x1a0] sm:$0xff]
                %331 = vst [vmem:[%s277 + $0xd0] sm:$0xff] %v330
                %v332 = vld [vmem:[%s276 + $0x1a8] sm:$0xff]
                %333 = vst [vmem:[%s277 + $0xd8] sm:$0xff] %v332
                %v334 = vld [vmem:[%s276 + $0x1c0] sm:$0xff]
                %335 = vst [vmem:[%s277 + $0xe0] sm:$0xff] %v334
                %v336 = vld [vmem:[%s276 + $0x1c8] sm:$0xff]
                %337 = vst [vmem:[%s277 + $0xe8] sm:$0xff] %v336
                %v338 = vld [vmem:[%s276 + $0x1e0] sm:$0xff]
                %339 = vst [vmem:[%s277 + $0xf0] sm:$0xff] %v338
                %v340 = vld [vmem:[%s276 + $0x1e8] sm:$0xff]
                %341 = vst [vmem:[%s277 + $0xf8] sm:$0xff] %v340
                %v342 = vld [vmem:[%s276 + $0x200] sm:$0xff]
                %343 = vst [vmem:[%s277 + $0x100] sm:$0xff] %v342
                %v344 = vld [vmem:[%s276 + $0x208] sm:$0xff]
                %345 = vst [vmem:[%s277 + $0x108] sm:$0xff] %v344
                %v346 = vld [vmem:[%s276 + $0x220] sm:$0xff]
                %347 = vst [vmem:[%s277 + $0x110] sm:$0xff] %v346
                %v348 = vld [vmem:[%s276 + $0x228] sm:$0xff]
                %349 = vst [vmem:[%s277 + $0x118] sm:$0xff] %v348
                %v350 = vld [vmem:[%s276 + $0x240] sm:$0xff]
                %351 = vst [vmem:[%s277 + $0x120] sm:$0xff] %v350
                %v352 = vld [vmem:[%s276 + $0x248] sm:$0xff]
                %353 = vst [vmem:[%s277 + $0x128] sm:$0xff] %v352
                %v354 = vld [vmem:[%s276 + $0x260] sm:$0xff]
                %355 = vst [vmem:[%s277 + $0x130] sm:$0xff] %v354
                %v356 = vld [vmem:[%s276 + $0x268] sm:$0xff]
                %357 = vst [vmem:[%s277 + $0x138] sm:$0xff] %v356
                %v358 = vld [vmem:[%s276 + $0x280] sm:$0xff]
                %359 = vst [vmem:[%s277 + $0x140] sm:$0xff] %v358
                %v360 = vld [vmem:[%s276 + $0x288] sm:$0xff]
                %361 = vst [vmem:[%s277 + $0x148] sm:$0xff] %v360
                %v362 = vld [vmem:[%s276 + $0x2a0] sm:$0xff]
                %363 = vst [vmem:[%s277 + $0x150] sm:$0xff] %v362
                %v364 = vld [vmem:[%s276 + $0x2a8] sm:$0xff]
                %365 = vst [vmem:[%s277 + $0x158] sm:$0xff] %v364
                %v366 = vld [vmem:[%s276 + $0x2c0] sm:$0xff]
                %367 = vst [vmem:[%s277 + $0x160] sm:$0xff] %v366
                %v368 = vld [vmem:[%s276 + $0x2c8] sm:$0xff]
                %369 = vst [vmem:[%s277 + $0x168] sm:$0xff] %v368
                %v370 = vld [vmem:[%s276 + $0x2e0] sm:$0xff]
                %371 = vst [vmem:[%s277 + $0x170] sm:$0xff] %v370
                %v372 = vld [vmem:[%s276 + $0x2e8] sm:$0xff]
                %373 = vst [vmem:[%s277 + $0x178] sm:$0xff] %v372
                %v374 = vld [vmem:[%s276 + $0x300] sm:$0xff]
                %375 = vst [vmem:[%s277 + $0x180] sm:$0xff] %v374
                %v376 = vld [vmem:[%s276 + $0x308] sm:$0xff]
                %377 = vst [vmem:[%s277 + $0x188] sm:$0xff] %v376
                %v378 = vld [vmem:[%s276 + $0x320] sm:$0xff]
                %379 = vst [vmem:[%s277 + $0x190] sm:$0xff] %v378
                %v380 = vld [vmem:[%s276 + $0x328] sm:$0xff]
                %381 = vst [vmem:[%s277 + $0x198] sm:$0xff] %v380
                %v382 = vld [vmem:[%s276 + $0x340] sm:$0xff]
                %383 = vst [vmem:[%s277 + $0x1a0] sm:$0xff] %v382
                %v384 = vld [vmem:[%s276 + $0x348] sm:$0xff]
                %385 = vst [vmem:[%s277 + $0x1a8] sm:$0xff] %v384
                %v386 = vld [vmem:[%s276 + $0x360] sm:$0xff]
                %387 = vst [vmem:[%s277 + $0x1b0] sm:$0xff] %v386
                %v388 = vld [vmem:[%s276 + $0x368] sm:$0xff]
                %389 = vst [vmem:[%s277 + $0x1b8] sm:$0xff] %v388
                %v390 = vld [vmem:[%s276 + $0x380] sm:$0xff]
                %391 = vst [vmem:[%s277 + $0x1c0] sm:$0xff] %v390
                %v392 = vld [vmem:[%s276 + $0x388] sm:$0xff]
                %393 = vst [vmem:[%s277 + $0x1c8] sm:$0xff] %v392
                %v394 = vld [vmem:[%s276 + $0x3a0] sm:$0xff]
                %395 = vst [vmem:[%s277 + $0x1d0] sm:$0xff] %v394
                %v396 = vld [vmem:[%s276 + $0x3a8] sm:$0xff]
                %397 = vst [vmem:[%s277 + $0x1d8] sm:$0xff] %v396
                %v398 = vld [vmem:[%s276 + $0x3c0] sm:$0xff]
                %399 = vst [vmem:[%s277 + $0x1e0] sm:$0xff] %v398
                %v400 = vld [vmem:[%s276 + $0x3c8] sm:$0xff]
                %401 = vst [vmem:[%s277 + $0x1e8] sm:$0xff] %v400
                %v402 = vld [vmem:[%s276 + $0x3e0] sm:$0xff]
                %403 = vst [vmem:[%s277 + $0x1f0] sm:$0xff] %v402
                %v404 = vld [vmem:[%s276 + $0x3e8] sm:$0xff]
                %405 = vst [vmem:[%s277 + $0x1f8] sm:$0xff] %v404
              $region53: #{mlp_head.1} parent=47 // loop_footer
                %s275 = sadd.s32 1, %s271
              $region54: #{mlp_head.1} parent=47 // loop_footer_branch
                %270 = sbr.rel target = $region50
              $region55: #{mlp_head.1} parent=47 // loop_exit
                _
            $region48: #{mlp_head.1} parent=43 // pred_fallthru
              _
            // Predicated region
            $region56: #{mlp_head.1} parent=43 // pred_check
              _
            $region57: #{mlp_head.1} parent=43 // pred_check_branch
              %407 = sbr.rel target = $region59
            $region58: #{mlp_head.1} parent=43 // pred_region
              _
            $region59: #{mlp_head.1} parent=43 // pred_fallthru
              _
          $region44: #{mlp_head.1} parent=39 // pred_fallthru
            _
          %408 = vnop
        $region40: #{mlp_head.1} parent=35 // pred_fallthru
          _
        // Predicated region
        $region60: #{mlp_head.1} parent=35 // pred_check
          %p409 = pneg %p184
        $region61: #{mlp_head.1} parent=35 // pred_check_branch
          %411 = sbr.rel (%p409) target = $region63
        $region62: #{mlp_head.1} parent=35 // pred_region
          %s412 = smul.u32 4, %s24
          %p413 = scmp.lt.s32.totalorder %s412, 7
          %s414 = scalar_select %p413, %s412, 7
          %s415 = scalar_lea.vmem %s6, %s414
          %s416 = smul.u32 4, %s24
        $region63: #{mlp_head.1} parent=35 // pred_fallthru
          _
      $region36: #{mlp_head.1} parent=5 // pred_fallthru
        _
      %p417 = scmp.le.s32.totalorder 1, %s16
      %p418 = scmp.lt.s32.totalorder %s16, 3
      %p419 = pnand %p417, %p418
      %p420 = pneg %p419
      // Predicated region
      $region64: #{mlp_head.1} parent=5 // pred_check
        _
      $region65: #{mlp_head.1} parent=5 // pred_check_branch
        %422 = sbr.rel (%p419) target = $region67
      $region66: #{mlp_head.1} parent=5 // pred_region
        %s423 = ssub.s32 %s16, 1
        %s424 = sand.u32 %s151, 1
        %s425 = sand.u32 %s151, 1
        %s426 = smul.addr %s425, 512
        %s427 = scalar_lea.vmem [#allocation3], %s426
        // Predicated region
        $region68: #{mlp_head.1} parent=66 // pred_check
          %p428 = pneg %p164
        $region69: #{mlp_head.1} parent=66 // pred_check_branch
          %430 = sbr.rel (%p428) target = $region71
        $region70: #{mlp_head.1} parent=66 // pred_region
          _
        $region71: #{mlp_head.1} parent=66 // pred_fallthru
          _
        %p431 = scmp.lt.s32.totalorder %s25, 0
        %s432 = scalar_select %p431, %s25, 0
        %s433 = smul.addr %s432, 4
        %s434 = scalar_lea.vmem %s0, %s433
        %p435 = pneg %p54
        %p436 = pneg %p51
        %p437 = pneg %p75
        %p438 = pneg %p72
        %p439 = pneg %p96
        %p440 = pneg %p93
        %p441 = pneg %p117
        %p442 = pneg %p114
        %p443 = pneg %p138
        %p444 = pneg %p135
        %s445 = sand.u32 %s151, 1
        %s446 = sand.u32 %s151, 1
        %s447 = smul.addr %s446, 512
        %s448 = scalar_lea.vmem [#allocation3], %s447
        %p449 = pneg %p164
        %p450 = pneg %p161
        %s451 = smul.u32 4, %s26
        %p452 = scmp.lt.s32.totalorder %s451, 7
        %s453 = scalar_select %p452, %s451, 7
        %s454 = scalar_lea.vmem %s6, %s453
        %p455 = pneg %p190
        %p456 = pneg %p187
        %p457 = pneg %p218
        %p458 = pneg %p215
        %s459 = sand.u32 %s205, 1
        %s460 = scalar_lea.sflag [#allocation5], %s459
        %s461 = sand.u32 %s205, 1
        %s462 = smul.addr %s461, 32
        %s463 = scalar_lea.vmem [#allocation4], %s462
        %p464 = scmp.lt.s32.totalorder %s25, 0
        %s465 = scalar_select %p464, %s25, 0
        %s466 = smul.addr %s465, 4
        %s467 = scalar_lea.vmem %s0, %s466
        %s468 = smul.u32 4, %s26
        %s469 = smul.u32 4, %s26
        %p470 = scmp.lt.s32.totalorder %s469, 7
        %s471 = scalar_select %p470, %s469, 7
        %s472 = scalar_lea.vmem %s6, %s471
        %s473 = smul.u32 4, %s26
        %s474 = smul.u32 4, %s26
        %p476 = scmp.eq.s32.totalorder %s26, 0
        // Predicated region
        $region72: #{mlp_head.1} parent=66 // pred_check
          %p477 = pneg %p476
        $region73: #{mlp_head.1} parent=66 // pred_check_branch
          %479 = sbr.rel (%p477) target = $region75
        $region74: #{mlp_head.1} parent=66 // pred_region
          %v480 = vld [vmem:[%s467] sm:$0xf]
          %v481 = vld [vmem:[%s1] sm:$0xff]
          %v482 = vld [vmem:[%s1 + $0x8] sm:$0xff]
          %v483 = vld [vmem:[%s1 + $0x10] sm:$0xff]
          %v484 = vld [vmem:[%s1 + $0x18] sm:$0xff]
          %v485 = vld [vmem:[%s1 + $0x20] sm:$0xff]
          %v486 = vld [vmem:[%s1 + $0x28] sm:$0xff]
          %v487 = vld [vmem:[%s1 + $0x30] sm:$0xff]
          %v488 = vld [vmem:[%s1 + $0x38] sm:$0xff]
          %v489 = vld [vmem:[%s2] sm:$0x3]
          %v491 = vlaneseq
          %v492 = vshrl.u32 %v491, 7
          %v493 = vsub.s32 0, %v492
          %v494 = vrot.slane %v489, %v493
          %v495 = vlaneseq
          %v496 = vshrl.u32 %v495, 7
          %v497 = vsub.s32 1, %v496
          %v498 = vrot.slane %v489, %v497
          %v509 = vunpack.c.l.b16 %v481
          %v510 = vunpack.c.h.b16 %v481
          %v511 = vunpack.c.l.b16 %v482
          %v512 = vunpack.c.h.b16 %v482
          %v513 = vunpack.c.l.b16 %v483
          %v514 = vunpack.c.h.b16 %v483
          %v515 = vunpack.c.l.b16 %v484
          %v516 = vunpack.c.h.b16 %v484
          %v517 = vunpack.c.l.b16 %v485
          %v518 = vunpack.c.h.b16 %v485
          %v519 = vunpack.c.l.b16 %v486
          %v520 = vunpack.c.h.b16 %v486
          %v521 = vunpack.c.l.b16 %v487
          %v522 = vunpack.c.h.b16 %v487
          %v523 = vunpack.c.l.b16 %v488
          %v524 = vunpack.c.h.b16 %v488
          %v525 = vpack.c.b16 %v511, %v509
          %v526 = vpack.c.b16 %v512, %v510
          %v527 = vpack.c.b16 %v515, %v513
          %v528 = vpack.c.b16 %v516, %v514
          %v529 = vpack.c.b16 %v519, %v517
          %v530 = vpack.c.b16 %v520, %v518
          %v531 = vpack.c.b16 %v523, %v521
          %v532 = vpack.c.b16 %v524, %v522
          %vm541 = vcmask 523264
          %v543 = vsel %vm541, %v480, 0
          %545 = vmatprep.subr.bf16.mxu0 %v526
          %546 = vmatpush1.bf16.msra.mxu0 %v525
          %547 = vmatprep.subr.bf16.mxu0 %v528
          %548 = vmatpush1.bf16.msra.mxu0 %v527
          %549 = vmatprep.subr.bf16.mxu0 %v530
          %550 = vmatpush1.bf16.msra.mxu0 %v529
          %551 = vmatprep.subr.bf16.mxu0 %v532
          %552 = vmatpush1.bf16.msra.mxu0 %v531
          %553 = vmatprep.subr.bf16.mxu0 0
          %554 = vmatpush1.bf16.msra.mxu0 0
          %555 = vmatprep.subr.bf16.mxu0 0
          %556 = vmatpush1.bf16.msra.mxu0 0
          %557 = vmatprep.subr.bf16.mxu0 0
          %558 = vmatpush1.bf16.msra.mxu0 0
          %559 = vmatprep.subr.bf16.mxu0 0
          %560 = vmatpush1.bf16.msra.mxu0 0
          %561 = vmatprep.subr.bf16.mxu0 0
          %562 = vmatpush1.bf16.msra.mxu0 0
          %563 = vmatprep.subr.bf16.mxu0 0
          %564 = vmatpush1.bf16.msra.mxu0 0
          %565 = vmatprep.subr.bf16.mxu0 0
          %566 = vmatpush1.bf16.msra.mxu0 0
          %567 = vmatprep.subr.bf16.mxu0 0
          %568 = vmatpush1.bf16.msra.mxu0 0
          %569 = vmatprep.subr.bf16.mxu0 0
          %570 = vmatpush1.bf16.msra.mxu0 0
          %571 = vmatprep.subr.bf16.mxu0 0
          %572 = vmatpush1.bf16.msra.mxu0 0
          %573 = vmatprep.subr.bf16.mxu0 0
          %574 = vmatpush1.bf16.msra.mxu0 0
          %575 = vmatprep.subr.bf16.mxu0 0
          %576 = vmatpush1.bf16.msra.mxu0 0
          %577 = vmatprep.mubr.bf16.mxu0 0
          %578 = vmatmul.mubr.bf16.gmra.mrb[0].mxu0 %v543
          %v579 = vpop.f32.mrb[0].mxu0
          %v580 = vadd.f32 %v494, %v579
          %v581 = vpop.f32.mrb[0].mxu0
          %v582 = vadd.f32 %v498, %v581
          %v583 = vpop.f32.mrb[0].mxu0
          %v584 = vpop.f32.mrb[0].mxu0
          %585 = vdwg.mxu0
          %v586 = vmul.f32 %v580, 0.5
          %v587 = vmul.f32 %v582, 0.5
          %v588 = vmul.f32 %v580, 0.70710677
          %v589 = vmul.f32 %v582, 0.70710677
          %v590 = verf.f32.pop %v588
          %v591 = verf.f32.pop %v589
          %v592 = vadd.f32 %v590, 1.0
          %v593 = vadd.f32 %v591, 1.0
          %v594 = vmul.f32 %v586, %v592
          %v595 = vmul.f32 %v587, %v593
          %v596 = vadd.f32 %v594, %v595
          %597 = vadd.xlane.f32.xlu0 %v596
          %v598 = vpop.xlane.xlu0 %597
          %v599 = vrcp.pop 256.0
          %v600 = vmul.f32 %v598, %v599
          %v601 = vsub.f32 %v594, %v600
          %v602 = vsub.f32 %v595, %v600
          %v603 = vmul.f32 %v601, %v601
          %v604 = vmul.f32 %v602, %v602
          %v605 = vadd.f32 %v603, %v604
          %606 = vadd.xlane.f32.xlu0 %v605
          %v607 = vpop.xlane.xlu0 %606
          %v608 = vmul.f32 %v607, %v599
          %v609 = vadd.f32 %v608, 1e-06
          %v610 = vrsqrt.pop %v609
          %v611 = vmul.f32 %v601, %v610
          %v612 = vmul.f32 %v602, %v610
          %v613 = vld [vmem:[%s3] sm:$0x3]
          %v615 = vlaneseq
          %v616 = vshrl.u32 %v615, 7
          %v617 = vsub.s32 0, %v616
          %v618 = vrot.slane %v613, %v617
          %v619 = vlaneseq
          %v620 = vshrl.u32 %v619, 7
          %v621 = vsub.s32 1, %v620
          %v622 = vrot.slane %v613, %v621
          %v625 = vmul.f32 %v611, %v618
          %v626 = vmul.f32 %v612, %v622
          %v627 = vld [vmem:[%s4] sm:$0x3]
          %v629 = vlaneseq
          %v630 = vshrl.u32 %v629, 7
          %v631 = vsub.s32 0, %v630
          %v632 = vrot.slane %v627, %v631
          %v633 = vlaneseq
          %v634 = vshrl.u32 %v633, 7
          %v635 = vsub.s32 1, %v634
          %v636 = vrot.slane %v627, %v635
          %v639 = vadd.f32 %v625, %v632
          %v640 = vadd.f32 %v626, %v636
          %v641 = vpack.c.bf16 %v639, %v639
          %v642 = vpack.c.bf16 %v640, %v640
          %v645 = vunpack.c.l.b16 %v641
          %v646 = vunpack.c.l.b16 %v642
          %v647 = vpack.c.b16 %v646, %v645
          %649 = vst [vmem:[#allocation2] sm:$0xff] %v647
        $region75: #{mlp_head.1} parent=66 // pred_fallthru
          _
        %v650 = vld [vmem:[#allocation2] sm:$0xff]
        %v651 = vld [vmem:[%s427] sm:$0xff]
        %v652 = vld [vmem:[%s427 + $0x8] sm:$0xff]
        %v653 = vld [vmem:[%s427 + $0x10] sm:$0xff]
        %v654 = vld [vmem:[%s427 + $0x18] sm:$0xff]
        %v655 = vld [vmem:[%s427 + $0x20] sm:$0xff]
        %v656 = vld [vmem:[%s427 + $0x28] sm:$0xff]
        %v657 = vld [vmem:[%s427 + $0x30] sm:$0xff]
        %v658 = vld [vmem:[%s427 + $0x38] sm:$0xff]
        %v659 = vld [vmem:[%s427 + $0x40] sm:$0xff]
        %v660 = vld [vmem:[%s427 + $0x48] sm:$0xff]
        %v661 = vld [vmem:[%s427 + $0x50] sm:$0xff]
        %v662 = vld [vmem:[%s427 + $0x58] sm:$0xff]
        %v663 = vld [vmem:[%s427 + $0x60] sm:$0xff]
        %v664 = vld [vmem:[%s427 + $0x68] sm:$0xff]
        %v665 = vld [vmem:[%s427 + $0x70] sm:$0xff]
        %v666 = vld [vmem:[%s427 + $0x78] sm:$0xff]
        %v667 = vld [vmem:[%s427 + $0x80] sm:$0xff]
        %v668 = vld [vmem:[%s427 + $0x88] sm:$0xff]
        %v669 = vld [vmem:[%s427 + $0x90] sm:$0xff]
        %v670 = vld [vmem:[%s427 + $0x98] sm:$0xff]
        %v671 = vld [vmem:[%s427 + $0xa0] sm:$0xff]
        %v672 = vld [vmem:[%s427 + $0xa8] sm:$0xff]
        %v673 = vld [vmem:[%s427 + $0xb0] sm:$0xff]
        %v674 = vld [vmem:[%s427 + $0xb8] sm:$0xff]
        %v675 = vld [vmem:[%s427 + $0xc0] sm:$0xff]
        %v676 = vld [vmem:[%s427 + $0xc8] sm:$0xff]
        %v677 = vld [vmem:[%s427 + $0xd0] sm:$0xff]
        %v678 = vld [vmem:[%s427 + $0xd8] sm:$0xff]
        %v679 = vld [vmem:[%s427 + $0xe0] sm:$0xff]
        %v680 = vld [vmem:[%s427 + $0xe8] sm:$0xff]
        %v681 = vld [vmem:[%s427 + $0xf0] sm:$0xff]
        %v682 = vld [vmem:[%s427 + $0xf8] sm:$0xff]
        %v683 = vld [vmem:[%s427 + $0x100] sm:$0xff]
        %v684 = vld [vmem:[%s427 + $0x108] sm:$0xff]
        %v685 = vld [vmem:[%s427 + $0x110] sm:$0xff]
        %v686 = vld [vmem:[%s427 + $0x118] sm:$0xff]
        %v687 = vld [vmem:[%s427 + $0x120] sm:$0xff]
        %v688 = vld [vmem:[%s427 + $0x128] sm:$0xff]
        %v689 = vld [vmem:[%s427 + $0x130] sm:$0xff]
        %v690 = vld [vmem:[%s427 + $0x138] sm:$0xff]
        %v691 = vld [vmem:[%s427 + $0x140] sm:$0xff]
        %v692 = vld [vmem:[%s427 + $0x148] sm:$0xff]
        %v693 = vld [vmem:[%s427 + $0x150] sm:$0xff]
        %v694 = vld [vmem:[%s427 + $0x158] sm:$0xff]
        %v695 = vld [vmem:[%s427 + $0x160] sm:$0xff]
        %v696 = vld [vmem:[%s427 + $0x168] sm:$0xff]
        %v697 = vld [vmem:[%s427 + $0x170] sm:$0xff]
        %v698 = vld [vmem:[%s427 + $0x178] sm:$0xff]
        %v699 = vld [vmem:[%s427 + $0x180] sm:$0xff]
        %v700 = vld [vmem:[%s427 + $0x188] sm:$0xff]
        %v701 = vld [vmem:[%s427 + $0x190] sm:$0xff]
        %v702 = vld [vmem:[%s427 + $0x198] sm:$0xff]
        %v703 = vld [vmem:[%s427 + $0x1a0] sm:$0xff]
        %v704 = vld [vmem:[%s427 + $0x1a8] sm:$0xff]
        %v705 = vld [vmem:[%s427 + $0x1b0] sm:$0xff]
        %v706 = vld [vmem:[%s427 + $0x1b8] sm:$0xff]
        %v707 = vld [vmem:[%s427 + $0x1c0] sm:$0xff]
        %v708 = vld [vmem:[%s427 + $0x1c8] sm:$0xff]
        %v709 = vld [vmem:[%s427 + $0x1d0] sm:$0xff]
        %v710 = vld [vmem:[%s427 + $0x1d8] sm:$0xff]
        %v711 = vld [vmem:[%s427 + $0x1e0] sm:$0xff]
        %v712 = vld [vmem:[%s427 + $0x1e8] sm:$0xff]
        %v713 = vld [vmem:[%s427 + $0x1f0] sm:$0xff]
        %v714 = vld [vmem:[%s427 + $0x1f8] sm:$0xff]
        %v715 = vld [vmem:[%s472] sm:$0xf]
        %v717 = vlaneseq
        %v718 = vshrl.u32 %v717, 7
        %v719 = vsub.s32 0, %v718
        %v720 = vrot.slane %v715, %v719
        %v721 = vlaneseq
        %v722 = vshrl.u32 %v721, 7
        %v723 = vsub.s32 1, %v722
        %v724 = vrot.slane %v715, %v723
        %v725 = vlaneseq
        %v726 = vshrl.u32 %v725, 7
        %v727 = vsub.s32 2, %v726
        %v728 = vrot.slane %v715, %v727
        %v729 = vlaneseq
        %v730 = vshrl.u32 %v729, 7
        %v731 = vsub.s32 3, %v730
        %v732 = vrot.slane %v715, %v731
        %v738 = vunpack.c.l.b16 %v650
        %v739 = vunpack.c.h.b16 %v650
        %v740 = vpack.c.b16 %v738, %v738
        %v741 = vpack.c.b16 %v739, %v739
        %v808 = vunpack.c.l.b16 %v651
        %v809 = vunpack.c.h.b16 %v651
        %v810 = vunpack.c.l.b16 %v652
        %v811 = vunpack.c.h.b16 %v652
        %v812 = vunpack.c.l.b16 %v653
        %v813 = vunpack.c.h.b16 %v653
        %v814 = vunpack.c.l.b16 %v654
        %v815 = vunpack.c.h.b16 %v654
        %v816 = vunpack.c.l.b16 %v655
        %v817 = vunpack.c.h.b16 %v655
        %v818 = vunpack.c.l.b16 %v656
        %v819 = vunpack.c.h.b16 %v656
        %v820 = vunpack.c.l.b16 %v657
        %v821 = vunpack.c.h.b16 %v657
        %v822 = vunpack.c.l.b16 %v658
        %v823 = vunpack.c.h.b16 %v658
        %v824 = vunpack.c.l.b16 %v659
        %v825 = vunpack.c.h.b16 %v659
        %v826 = vunpack.c.l.b16 %v660
        %v827 = vunpack.c.h.b16 %v660
        %v828 = vunpack.c.l.b16 %v661
        %v829 = vunpack.c.h.b16 %v661
        %v830 = vunpack.c.l.b16 %v662
        %v831 = vunpack.c.h.b16 %v662
        %v832 = vunpack.c.l.b16 %v663
        %v833 = vunpack.c.h.b16 %v663
        %v834 = vunpack.c.l.b16 %v664
        %v835 = vunpack.c.h.b16 %v664
        %v836 = vunpack.c.l.b16 %v665
        %v837 = vunpack.c.h.b16 %v665
        %v838 = vunpack.c.l.b16 %v666
        %v839 = vunpack.c.h.b16 %v666
        %v840 = vunpack.c.l.b16 %v667
        %v841 = vunpack.c.h.b16 %v667
        %v842 = vunpack.c.l.b16 %v668
        %v843 = vunpack.c.h.b16 %v668
        %v844 = vunpack.c.l.b16 %v669
        %v845 = vunpack.c.h.b16 %v669
        %v846 = vunpack.c.l.b16 %v670
        %v847 = vunpack.c.h.b16 %v670
        %v848 = vunpack.c.l.b16 %v671
        %v849 = vunpack.c.h.b16 %v671
        %v850 = vunpack.c.l.b16 %v672
        %v851 = vunpack.c.h.b16 %v672
        %v852 = vunpack.c.l.b16 %v673
        %v853 = vunpack.c.h.b16 %v673
        %v854 = vunpack.c.l.b16 %v674
        %v855 = vunpack.c.h.b16 %v674
        %v856 = vunpack.c.l.b16 %v675
        %v857 = vunpack.c.h.b16 %v675
        %v858 = vunpack.c.l.b16 %v676
        %v859 = vunpack.c.h.b16 %v676
        %v860 = vunpack.c.l.b16 %v677
        %v861 = vunpack.c.h.b16 %v677
        %v862 = vunpack.c.l.b16 %v678
        %v863 = vunpack.c.h.b16 %v678
        %v864 = vunpack.c.l.b16 %v679
        %v865 = vunpack.c.h.b16 %v679
        %v866 = vunpack.c.l.b16 %v680
        %v867 = vunpack.c.h.b16 %v680
        %v868 = vunpack.c.l.b16 %v681
        %v869 = vunpack.c.h.b16 %v681
        %v870 = vunpack.c.l.b16 %v682
        %v871 = vunpack.c.h.b16 %v682
        %v872 = vunpack.c.l.b16 %v683
        %v873 = vunpack.c.h.b16 %v683
        %v874 = vunpack.c.l.b16 %v684
        %v875 = vunpack.c.h.b16 %v684
        %v876 = vunpack.c.l.b16 %v685
        %v877 = vunpack.c.h.b16 %v685
        %v878 = vunpack.c.l.b16 %v686
        %v879 = vunpack.c.h.b16 %v686
        %v880 = vunpack.c.l.b16 %v687
        %v881 = vunpack.c.h.b16 %v687
        %v882 = vunpack.c.l.b16 %v688
        %v883 = vunpack.c.h.b16 %v688
        %v884 = vunpack.c.l.b16 %v689
        %v885 = vunpack.c.h.b16 %v689
        %v886 = vunpack.c.l.b16 %v690
        %v887 = vunpack.c.h.b16 %v690
        %v888 = vunpack.c.l.b16 %v691
        %v889 = vunpack.c.h.b16 %v691
        %v890 = vunpack.c.l.b16 %v692
        %v891 = vunpack.c.h.b16 %v692
        %v892 = vunpack.c.l.b16 %v693
        %v893 = vunpack.c.h.b16 %v693
        %v894 = vunpack.c.l.b16 %v694
        %v895 = vunpack.c.h.b16 %v694
        %v896 = vunpack.c.l.b16 %v695
        %v897 = vunpack.c.h.b16 %v695
        %v898 = vunpack.c.l.b16 %v696
        %v899 = vunpack.c.h.b16 %v696
        %v900 = vunpack.c.l.b16 %v697
        %v901 = vunpack.c.h.b16 %v697
        %v902 = vunpack.c.l.b16 %v698
        %v903 = vunpack.c.h.b16 %v698
        %v904 = vunpack.c.l.b16 %v699
        %v905 = vunpack.c.h.b16 %v699
        %v906 = vunpack.c.l.b16 %v700
        %v907 = vunpack.c.h.b16 %v700
        %v908 = vunpack.c.l.b16 %v701
        %v909 = vunpack.c.h.b16 %v701
        %v910 = vunpack.c.l.b16 %v702
        %v911 = vunpack.c.h.b16 %v702
        %v912 = vunpack.c.l.b16 %v703
        %v913 = vunpack.c.h.b16 %v703
        %v914 = vunpack.c.l.b16 %v704
        %v915 = vunpack.c.h.b16 %v704
        %v916 = vunpack.c.l.b16 %v705
        %v917 = vunpack.c.h.b16 %v705
        %v918 = vunpack.c.l.b16 %v706
        %v919 = vunpack.c.h.b16 %v706
        %v920 = vunpack.c.l.b16 %v707
        %v921 = vunpack.c.h.b16 %v707
        %v922 = vunpack.c.l.b16 %v708
        %v923 = vunpack.c.h.b16 %v708
        %v924 = vunpack.c.l.b16 %v709
        %v925 = vunpack.c.h.b16 %v709
        %v926 = vunpack.c.l.b16 %v710
        %v927 = vunpack.c.h.b16 %v710
        %v928 = vunpack.c.l.b16 %v711
        %v929 = vunpack.c.h.b16 %v711
        %v930 = vunpack.c.l.b16 %v712
        %v931 = vunpack.c.h.b16 %v712
        %v932 = vunpack.c.l.b16 %v713
        %v933 = vunpack.c.h.b16 %v713
        %v934 = vunpack.c.l.b16 %v714
        %v935 = vunpack.c.h.b16 %v714
        %v936 = vpack.c.b16 %v812, %v808
        %v937 = vpack.c.b16 %v813, %v809
        %v938 = vpack.c.b16 %v814, %v810
        %v939 = vpack.c.b16 %v815, %v811
        %v940 = vpack.c.b16 %v820, %v816
        %v941 = vpack.c.b16 %v821, %v817
        %v942 = vpack.c.b16 %v822, %v818
        %v943 = vpack.c.b16 %v823, %v819
        %v944 = vpack.c.b16 %v828, %v824
        %v945 = vpack.c.b16 %v829, %v825
        %v946 = vpack.c.b16 %v830, %v826
        %v947 = vpack.c.b16 %v831, %v827
        %v948 = vpack.c.b16 %v836, %v832
        %v949 = vpack.c.b16 %v837, %v833
        %v950 = vpack.c.b16 %v838, %v834
        %v951 = vpack.c.b16 %v839, %v835
        %v952 = vpack.c.b16 %v844, %v840
        %v953 = vpack.c.b16 %v845, %v841
        %v954 = vpack.c.b16 %v846, %v842
        %v955 = vpack.c.b16 %v847, %v843
        %v956 = vpack.c.b16 %v852, %v848
        %v957 = vpack.c.b16 %v853, %v849
        %v958 = vpack.c.b16 %v854, %v850
        %v959 = vpack.c.b16 %v855, %v851
        %v960 = vpack.c.b16 %v860, %v856
        %v961 = vpack.c.b16 %v861, %v857
        %v962 = vpack.c.b16 %v862, %v858
        %v963 = vpack.c.b16 %v863, %v859
        %v964 = vpack.c.b16 %v868, %v864
        %v965 = vpack.c.b16 %v869, %v865
        %v966 = vpack.c.b16 %v870, %v866
        %v967 = vpack.c.b16 %v871, %v867
        %v968 = vpack.c.b16 %v876, %v872
        %v969 = vpack.c.b16 %v877, %v873
        %v970 = vpack.c.b16 %v878, %v874
        %v971 = vpack.c.b16 %v879, %v875
        %v972 = vpack.c.b16 %v884, %v880
        %v973 = vpack.c.b16 %v885, %v881
        %v974 = vpack.c.b16 %v886, %v882
        %v975 = vpack.c.b16 %v887, %v883
        %v976 = vpack.c.b16 %v892, %v888
        %v977 = vpack.c.b16 %v893, %v889
        %v978 = vpack.c.b16 %v894, %v890
        %v979 = vpack.c.b16 %v895, %v891
        %v980 = vpack.c.b16 %v900, %v896
        %v981 = vpack.c.b16 %v901, %v897
        %v982 = vpack.c.b16 %v902, %v898
        %v983 = vpack.c.b16 %v903, %v899
        %v984 = vpack.c.b16 %v908, %v904
        %v985 = vpack.c.b16 %v909, %v905
        %v986 = vpack.c.b16 %v910, %v906
        %v987 = vpack.c.b16 %v911, %v907
        %v988 = vpack.c.b16 %v916, %v912
        %v989 = vpack.c.b16 %v917, %v913
        %v990 = vpack.c.b16 %v918, %v914
        %v991 = vpack.c.b16 %v919, %v915
        %v992 = vpack.c.b16 %v924, %v920
        %v993 = vpack.c.b16 %v925, %v921
        %v994 = vpack.c.b16 %v926, %v922
        %v995 = vpack.c.b16 %v927, %v923
        %v996 = vpack.c.b16 %v932, %v928
        %v997 = vpack.c.b16 %v933, %v929
        %v998 = vpack.c.b16 %v934, %v930
        %v999 = vpack.c.b16 %v935, %v931
        %1064 = vmatprep.subr.bf16.mxu0 %v937
        %1065 = vmatpush1.bf16.msra.mxu0 %v936
        %1066 = vmatprep.subr.bf16.mxu0 %v941
        %1067 = vmatpush1.bf16.msra.mxu0 %v940
        %1068 = vmatprep.subr.bf16.mxu0 %v945
        %1069 = vmatpush1.bf16.msra.mxu0 %v944
        %1070 = vmatprep.subr.bf16.mxu0 %v949
        %1071 = vmatpush1.bf16.msra.mxu0 %v948
        %1072 = vmatprep.subr.bf16.mxu0 %v953
        %1073 = vmatpush1.bf16.msra.mxu0 %v952
        %1074 = vmatprep.subr.bf16.mxu0 %v957
        %1075 = vmatpush1.bf16.msra.mxu0 %v956
        %1076 = vmatprep.subr.bf16.mxu0 %v961
        %1077 = vmatpush1.bf16.msra.mxu0 %v960
        %1078 = vmatprep.subr.bf16.mxu0 %v965
        %1079 = vmatpush1.bf16.msra.mxu0 %v964
        %1080 = vmatprep.subr.bf16.mxu0 %v969
        %1081 = vmatpush1.bf16.msra.mxu0 %v968
        %1082 = vmatprep.subr.bf16.mxu0 %v973
        %1083 = vmatpush1.bf16.msra.mxu0 %v972
        %1084 = vmatprep.subr.bf16.mxu0 %v977
        %1085 = vmatpush1.bf16.msra.mxu0 %v976
        %1086 = vmatprep.subr.bf16.mxu0 %v981
        %1087 = vmatpush1.bf16.msra.mxu0 %v980
        %1088 = vmatprep.subr.bf16.mxu0 %v985
        %1089 = vmatpush1.bf16.msra.mxu0 %v984
        %1090 = vmatprep.subr.bf16.mxu0 %v989
        %1091 = vmatpush1.bf16.msra.mxu0 %v988
        %1092 = vmatprep.subr.bf16.mxu0 %v993
        %1093 = vmatpush1.bf16.msra.mxu0 %v992
        %1094 = vmatprep.subr.bf16.mxu0 %v997
        %1095 = vmatpush1.bf16.msra.mxu0 %v996
        %1096 = vmatprep.mubr.bf16.mxu0 %v741
        %1097 = vmatmul.mubr.bf16.gmra.mrb[0].mxu0 %v740
        %v1098 = vpop.f32.mrb[0].mxu0
        %v1099 = vadd.f32 %v720, %v1098
        %v1100 = vpop.f32.mrb[0].mxu0
        %v1101 = vadd.f32 %v724, %v1100
        %v1102 = vpop.f32.mrb[0].mxu0
        %v1103 = vpop.f32.mrb[0].mxu0
        %1104 = vdwg.mxu0
        %1105 = vmatprep.subr.bf16.mxu0 %v939
        %1106 = vmatpush1.bf16.msra.mxu0 %v938
        %1107 = vmatprep.subr.bf16.mxu0 %v943
        %1108 = vmatpush1.bf16.msra.mxu0 %v942
        %1109 = vmatprep.subr.bf16.mxu0 %v947
        %1110 = vmatpush1.bf16.msra.mxu0 %v946
        %1111 = vmatprep.subr.bf16.mxu0 %v951
        %1112 = vmatpush1.bf16.msra.mxu0 %v950
        %1113 = vmatprep.subr.bf16.mxu0 %v955
        %1114 = vmatpush1.bf16.msra.mxu0 %v954
        %1115 = vmatprep.subr.bf16.mxu0 %v959
        %1116 = vmatpush1.bf16.msra.mxu0 %v958
        %1117 = vmatprep.subr.bf16.mxu0 %v963
        %1118 = vmatpush1.bf16.msra.mxu0 %v962
        %1119 = vmatprep.subr.bf16.mxu0 %v967
        %1120 = vmatpush1.bf16.msra.mxu0 %v966
        %1121 = vmatprep.subr.bf16.mxu0 %v971
        %1122 = vmatpush1.bf16.msra.mxu0 %v970
        %1123 = vmatprep.subr.bf16.mxu0 %v975
        %1124 = vmatpush1.bf16.msra.mxu0 %v974
        %1125 = vmatprep.subr.bf16.mxu0 %v979
        %1126 = vmatpush1.bf16.msra.mxu0 %v978
        %1127 = vmatprep.subr.bf16.mxu0 %v983
        %1128 = vmatpush1.bf16.msra.mxu0 %v982
        %1129 = vmatprep.subr.bf16.mxu0 %v987
        %1130 = vmatpush1.bf16.msra.mxu0 %v986
        %1131 = vmatprep.subr.bf16.mxu0 %v991
        %1132 = vmatpush1.bf16.msra.mxu0 %v990
        %1133 = vmatprep.subr.bf16.mxu0 %v995
        %1134 = vmatpush1.bf16.msra.mxu0 %v994
        %1135 = vmatprep.subr.bf16.mxu0 %v999
        %1136 = vmatpush1.bf16.msra.mxu0 %v998
        %1137 = vmatprep.mubr.bf16.mxu0 %v741
        %1138 = vmatmul.mubr.bf16.gmra.mrb[0].mxu0 %v740
        %v1139 = vpop.f32.mrb[0].mxu0
        %v1140 = vadd.f32 %v728, %v1139
        %v1141 = vpop.f32.mrb[0].mxu0
        %v1142 = vadd.f32 %v732, %v1141
        %v1143 = vpop.f32.mrb[0].mxu0
        %v1144 = vpop.f32.mrb[0].mxu0
        %1145 = vdwg.mxu0
        %1146 = vst [vmem:[%s463] sm:$0xff] %v1099
        %1147 = vst [vmem:[%s463 + $0x8] sm:$0xff] %v1101
        %1148 = vst [vmem:[%s463 + $0x10] sm:$0xff] %v1140
        %1149 = vst [vmem:[%s463 + $0x18] sm:$0xff] %v1142
        %s1150 = sand.u32 %s205, 1
        %s1151 = scalar_lea.sflag [#allocation5], %s1150
        %s1152 = sand.u32 %s205, 1
        %s1153 = smul.addr %s1152, 32
        %s1154 = scalar_lea.vmem [#allocation4], %s1153
        // Predicated region
        $region76: #{mlp_head.1} parent=66 // pred_check
          %p1155 = pneg %p215
        $region77: #{mlp_head.1} parent=66 // pred_check_branch
          %1157 = sbr.rel (%p1155) target = $region79
        $region78: #{mlp_head.1} parent=66 // pred_region
          %s1158 = smul.u32 4, %s26
          %s1160 = ssub.s32 512, 512
          %1161 = vsyncadd %s1151, %s1160
          %s1162 = smul.addr %s25, 8
          %s1163 = sadd.s32 %s1158, %s1162
          %s1164 = smul.addr %s1163, 128
          %s1165 = scalar_lea.hbm %s7, %s1164
          %s1167 = sshll.u32 %s1154, 4
          %s1168 = int_to_ptr.vmem [resolvable:$true] %s1167
          %1170 = dma.vmem_to_hbm [thread:$0]  %s1168, 512, %s1165, %s1151
        $region79: #{mlp_head.1} parent=66 // pred_fallthru
          _
      $region67: #{mlp_head.1} parent=5 // pred_fallthru
        _
      %p1171 = scmp.le.s32.totalorder 2, %s16
      // Predicated region
      $region80: #{mlp_head.1} parent=5 // pred_check
        %p1172 = pneg %p1171
      $region81: #{mlp_head.1} parent=5 // pred_check_branch
        %1174 = sbr.rel (%p1172) target = $region83
      $region82: #{mlp_head.1} parent=5 // pred_region
        %s1175 = ssub.s32 %s16, 2
        // Predicated region
        $region84: #{mlp_head.1} parent=82 // pred_check
          %p1176 = pneg %p221
        $region85: #{mlp_head.1} parent=82 // pred_check_branch
          %1178 = sbr.rel (%p1176) target = $region87
        $region86: #{mlp_head.1} parent=82 // pred_region
          %s1179 = sand.u32 %s206, 1
          %s1180 = scalar_lea.sflag [#allocation5], %s1179
          %s1181 = sand.u32 %s206, 1
          %s1182 = smul.addr %s1181, 32
          %s1183 = scalar_lea.vmem [#allocation4], %s1182
          %1184 = dma.done %s1180, 512
        $region87: #{mlp_head.1} parent=82 // pred_fallthru
          _
      $region83: #{mlp_head.1} parent=5 // pred_fallthru
        _
    $region6: #{mlp_head.1} parent=1 // loop_footer
      %s20 = sadd.s32 1, %s16
    $region7: #{mlp_head.1} parent=1 // loop_footer_branch
      %15 = sbr.rel target = $region3
    $region8: #{mlp_head.1} parent=1 // loop_exit
      _
    %1185 = vsyncpa [#allocation5], 1
    %s1186 = scalar_lea.sflag [#allocation5], 1
    %1187 = vsyncpa %s1186, 1

</llo_original>
